<compile_context>
chip_gen: v7x
topology: tpu7x:2x2x1
jax: 0.10.0
libtpu: 0.0.40
codegen_flags: <defaults>
</compile_context>

<pallas_src>
import math

import jax
import jax.numpy as jnp
from jax import lax
from jax.experimental import pallas as pl
from jax.experimental.pallas import tpu as pltpu


# ---------------------------------------------------------------------------
# Tiled linear (x @ W.T) with PyTorch-layout weights kept resident in VMEM.
# ---------------------------------------------------------------------------
def _linear_kernel(x_ref, w_ref, o_ref):
    # x_ref: [TM, K]   w_ref: [N, K] (PyTorch nn.Linear layout)   o_ref: [TM, N]
    o_ref[...] = lax.dot_general(
        x_ref[...], w_ref[...],
        dimension_numbers=(((1,), (1,)), ((), ())),   # contract K with K (no transpose op)
        preferred_element_type=jnp.float32,
    ).astype(o_ref.dtype)


def _linear(x2d, w, *, tm=512):
    """x2d: [M, K], w: [N, K] (PyTorch layout). Returns x2d @ w.T -> [M, N]."""
    M, K = x2d.shape
    N = w.shape[0]
    TM = min(tm, M)
    grid = (pl.cdiv(M, TM),)

    itemsize = jnp.dtype(x2d.dtype).itemsize
    cost = pl.CostEstimate(
        flops=2 * M * K * N,
        transcendentals=0,
        bytes_accessed=(M * K + N * K + M * N) * itemsize,
    )

    return pl.pallas_call(
        _linear_kernel,
        out_shape=jax.ShapeDtypeStruct((M, N), x2d.dtype),
        grid_spec=pltpu.PrefetchScalarGridSpec(
            num_scalar_prefetch=0,
            grid=grid,
            in_specs=[
                pl.BlockSpec((TM, K), lambda i: (i, 0)),   # activation tile (pipelined)
                pl.BlockSpec((N, K), lambda i: (0, 0)),    # weight stays resident
            ],
            out_specs=pl.BlockSpec((TM, N), lambda i: (i, 0)),
        ),
        compiler_params=pltpu.CompilerParams(
            dimension_semantics=("parallel",)),
        cost_estimate=cost,
    )(x2d, w)


# ---------------------------------------------------------------------------
# Fused (QK^T + position_bias) -> softmax -> @V per (batch, head).
# ---------------------------------------------------------------------------
def _attention_kernel(q_ref, k_ref, v_ref, bias_ref, o_ref):
    # q_ref/k_ref/v_ref: [S, d_kv]   bias_ref: [S, S]   o_ref: [S, d_kv]
    scores = lax.dot_general(
        q_ref[...], k_ref[...],
        dimension_numbers=(((1,), (1,)), ((), ())),   # q @ k^T, no 1/sqrt(d_kv) scaling (T5)
        preferred_element_type=jnp.float32,
    )
    scores = scores + bias_ref[...].astype(jnp.float32)
    scores = scores - jnp.max(scores, axis=-1, keepdims=True)
    p = jnp.exp(scores)
    p = p / jnp.sum(p, axis=-1, keepdims=True)
    # dropout -> identity (eval mode); layer_head_mask=None path
    o_ref[...] = jnp.dot(
        p.astype(v_ref.dtype), v_ref[...],
        preferred_element_type=jnp.float32,
    ).astype(o_ref.dtype)


def _attention(q, k, v, position_bias):
    """q/k/v: [B, H, S, d_kv]; position_bias: [1 or B, H, S, S] -> [B, H, S, d_kv]."""
    B, H, S, d_kv = q.shape
    bias_b = position_bias.shape[0]

    if bias_b == 1:
        bias_idx = lambda b, h: (0, h, 0, 0)
    else:
        bias_idx = lambda b, h: (b, h, 0, 0)

    itemsize = jnp.dtype(q.dtype).itemsize
    cost = pl.CostEstimate(
        flops=4 * B * H * S * S * d_kv,
        transcendentals=B * H * S * S,
        bytes_accessed=(4 * B * H * S * d_kv + bias_b * H * S * S) * itemsize,
    )

    qkv_spec = pl.BlockSpec((None, None, S, d_kv), lambda b, h: (b, h, 0, 0))

    return pl.pallas_call(
        _attention_kernel,
        out_shape=jax.ShapeDtypeStruct((B, H, S, d_kv), q.dtype),
        grid_spec=pltpu.PrefetchScalarGridSpec(
            num_scalar_prefetch=0,
            grid=(B, H),
            in_specs=[
                qkv_spec,  # q
                qkv_spec,  # k
                qkv_spec,  # v
                pl.BlockSpec((None, None, S, S), bias_idx),
            ],
            out_specs=pl.BlockSpec((None, None, S, d_kv), lambda b, h: (b, h, 0, 0)),
        ),
        compiler_params=pltpu.CompilerParams(
            dimension_semantics=("parallel", "parallel")),
        cost_estimate=cost,
    )(q, k, v, position_bias)


# ---------------------------------------------------------------------------
# Relative position bias (compute_bias) -- small gather/log work, plain JAX.
# ---------------------------------------------------------------------------
def _relative_position_bucket(relative_position, bidirectional, num_buckets, max_distance):
    relative_buckets = jnp.zeros_like(relative_position)
    if bidirectional:
        num_buckets //= 2
        relative_buckets = relative_buckets + (relative_position > 0).astype(jnp.int32) * num_buckets
        relative_position = jnp.abs(relative_position)
    else:
        relative_position = -jnp.minimum(relative_position, 0)
    max_exact = num_buckets // 2
    is_small = relative_position < max_exact
    rel_if_large = max_exact + (
        jnp.log(relative_position.astype(jnp.float32) / max_exact)
        / math.log(max_distance / max_exact)
        * (num_buckets - max_exact)
    ).astype(jnp.int32)
    rel_if_large = jnp.minimum(rel_if_large, num_buckets - 1)
    relative_buckets = relative_buckets + jnp.where(is_small, relative_position, rel_if_large)
    return relative_buckets


def _compute_bias(rel_bias_table, query_length, key_length, *,
                  bidirectional, num_buckets, max_distance):
    # rel_bias_table: [num_buckets, n_heads] (nn.Embedding weight)
    context_position = jnp.arange(query_length, dtype=jnp.int32)[:, None]
    memory_position = jnp.arange(key_length, dtype=jnp.int32)[None, :]
    relative_position = memory_position - context_position
    rp_bucket = _relative_position_bucket(
        relative_position, bidirectional, num_buckets, max_distance)
    values = rel_bias_table[rp_bucket]                       # [q, k, H]
    values = jnp.transpose(values, (2, 0, 1))[None]          # [1, H, q, k]
    return values


# ---------------------------------------------------------------------------
# Full T5Attention forward (self-attention, no KV cache, no cross-attention).
# ---------------------------------------------------------------------------
def t5_attention(hidden_states, wqkv, wo, *, n_heads, d_kv,
                 rel_bias_table=None, position_bias=None, mask=None,
                 is_decoder=False, num_buckets=32, max_distance=128):
    """
    hidden_states: [B, S, d_model]
    wqkv: [3*d_model, d_model]   (PyTorch nn.Linear layout of self.qkv; inner_dim == d_model)
    wo:   [d_model, inner_dim]   (PyTorch nn.Linear layout of self.o)
    Returns (attn_output [B, S, d_model], present_key_value=None, position_bias).
    """
    B, S, d_model = hidden_states.shape
    inner_dim = n_heads * d_kv

    # --- fused QKV projection (tiled GEMM, weights resident) -----------------
    qkv = _linear(hidden_states.reshape(B * S, d_model), wqkv)        # [B*S, 3*inner_dim]
    qkv = qkv.reshape(B, S, 3, n_heads, d_kv)
    q = jnp.transpose(qkv[:, :, 0], (0, 2, 1, 3))                     # [B, H, S, d_kv]
    k = jnp.transpose(qkv[:, :, 1], (0, 2, 1, 3))
    v = jnp.transpose(qkv[:, :, 2], (0, 2, 1, 3))

    # --- position bias --------------------------------------------------------
    if position_bias is None:
        if rel_bias_table is None:
            position_bias = jnp.zeros((1, n_heads, S, S), dtype=hidden_states.dtype)
        else:
            position_bias = _compute_bias(
                rel_bias_table, S, S,
                bidirectional=not is_decoder,
                num_buckets=num_buckets, max_distance=max_distance,
            ).astype(hidden_states.dtype)
        if mask is not None:
            position_bias = position_bias + mask                      # broadcasts to [B, H, S, S]

    # --- fused add-bias + softmax + @V ---------------------------------------
    ctx = _attention(q, k, v, position_bias)                          # [B, H, S, d_kv]
    ctx = jnp.transpose(ctx, (0, 2, 1, 3)).reshape(B * S, inner_dim)  # unshape()

    # --- output projection ----------------------------------------------------
    out = _linear(ctx, wo).reshape(B, S, d_model)

    present_key_value = None  # decoder cache path not exercised here
    return out, present_key_value, position_bias


# ---------------------------------------------------------------------------
# Pure-JAX reference for verification.
# ---------------------------------------------------------------------------
def _reference(hidden_states, wqkv, wo, position_bias, n_heads, d_kv):
    B, S, d_model = hidden_states.shape
    inner_dim = n_heads * d_kv
    qkv = jnp.einsum("bsd,nd->bsn", hidden_states, wqkv)
    q = qkv[..., :inner_dim].reshape(B, S, n_heads, d_kv).transpose(0, 2, 1, 3)
    k = qkv[..., inner_dim:2 * inner_dim].reshape(B, S, n_heads, d_kv).transpose(0, 2, 1, 3)
    v = qkv[..., 2 * inner_dim:].reshape(B, S, n_heads, d_kv).transpose(0, 2, 1, 3)
    scores = jnp.einsum("bhqd,bhkd->bhqk", q, k) + position_bias
    w = jax.nn.softmax(scores.astype(jnp.float32), axis=-1).astype(scores.dtype)
    ctx = jnp.einsum("bhqk,bhkd->bhqd", w, v)
    ctx = ctx.transpose(0, 2, 1, 3).reshape(B, S, inner_dim)
    return jnp.einsum("bsf,df->bsd", ctx, wo)


if __name__ == "__main__":
    # Small T5-like config: batch=2, seq=8, d_model=32, n_heads=4, d_kv=8 (inner_dim=32)
    B, S, d_model = 2, 8, 32
    n_heads, d_kv = 4, 8
    num_buckets, max_distance = 32, 128
    inner_dim = n_heads * d_kv

    key = jax.random.PRNGKey(0)
    kx, kqkv, ko, kb = jax.random.split(key, 4)

    x = jax.random.normal(kx, (B, S, d_model), dtype=jnp.float32)
    wqkv = jax.random.normal(kqkv, (3 * d_model, d_model), dtype=jnp.float32) * (d_model ** -0.5)
    wo = jax.random.normal(ko, (d_model, inner_dim), dtype=jnp.float32) * (inner_dim ** -0.5)
    rel_bias_table = jax.random.normal(kb, (num_buckets, n_heads), dtype=jnp.float32) * 0.1

    out, _, pos_bias = t5_attention(
        x, wqkv, wo, n_heads=n_heads, d_kv=d_kv,
        rel_bias_table=rel_bias_table, is_decoder=False,
        num_buckets=num_buckets, max_distance=max_distance)
    out = jax.block_until_ready(out)

    ref = _reference(x, wqkv, wo, pos_bias, n_heads, d_kv)
    assert out.shape == (B, S, d_model)
    assert jnp.allclose(out, ref, atol=1e-4, rtol=1e-4), "mismatch vs reference"

    print("KERNEL_OK")
</pallas_src>

<mosaic_0001>
module attributes {stable_mosaic.version = 11 : i64} {
  func.func @_linear_kernel(%arg0: i32, %arg1: memref<16x32xf32, #tpu.memory_space<vmem>>, %arg2: memref<96x32xf32, #tpu.memory_space<vmem>>, %arg3: memref<16x96xf32, #tpu.memory_space<vmem>>) attributes {dimension_semantics = [#tpu.dimension_semantics<parallel>], iteration_bounds = array<i64: 1>, scalar_prefetch = 0 : i64, scratch_operands = 0 : i64, tpu.core_type = #tpu.core_type<tc>, window_params = [{transform_indices = @transform_0, window_bounds = array<i64: 16, 32>}, {pipeline_mode = #tpu.pipeline_mode<synchronous>, transform_indices = @transform_1, window_bounds = array<i64: 96, 32>}, {transform_indices = @transform_2, window_bounds = array<i64: 16, 96>}]} {
    %c0 = arith.constant 0 : index
    %c0_0 = arith.constant 0 : index
    %0 = vector.load %arg1[%c0, %c0_0] : memref<16x32xf32, #tpu.memory_space<vmem>>, vector<16x32xf32>
    %c0_1 = arith.constant 0 : index
    %c0_2 = arith.constant 0 : index
    %1 = vector.load %arg2[%c0_1, %c0_2] : memref<96x32xf32, #tpu.memory_space<vmem>>, vector<96x32xf32>
    %cst = arith.constant dense<0.000000e+00> : vector<16x96xf32>
    %2 = tpu.matmul %0, %1, %cst {dimension_numbers = #tpu.dot_dimension_numbers<[1], [1], [0], [0], [0, 0, 1, 0], [], []>} : vector<16x32xf32>, vector<96x32xf32>, vector<16x96xf32> -> vector<16x96xf32>
    %c0_3 = arith.constant 0 : index
    %c0_4 = arith.constant 0 : index
    %3 = vector.load %arg3[%c0_3, %c0_4] : memref<16x96xf32, #tpu.memory_space<vmem>>, vector<16x96xf32>
    tpu.vector_store %arg3[%c0_3, %c0_4], %2 {strides = array<i32>} : memref<16x96xf32, #tpu.memory_space<vmem>>, vector<16x96xf32>,
    return
  }
  func.func @transform_0(%arg0: i32) -> (i32, i32) {
    %c0_i32 = arith.constant 0 : i32
    %c0_i32_0 = arith.constant 0 : i32
    return %arg0, %c0_i32 : i32, i32
  }
  func.func @transform_1(%arg0: i32) -> (i32, i32) {
    %c0_i32 = arith.constant 0 : i32
    %c0_i32_0 = arith.constant 0 : i32
    %c0_i32_1 = arith.constant 0 : i32
    return %c0_i32, %c0_i32_0 : i32, i32
  }
  func.func @transform_2(%arg0: i32) -> (i32, i32) {
    %c0_i32 = arith.constant 0 : i32
    %c0_i32_0 = arith.constant 0 : i32
    return %arg0, %c0_i32 : i32, i32
  }
}

</mosaic_0001>

<llo_original>
// kernel: tpu_custom_call.1
$region0: #{tpu_custom_call.1}
  #allocation0 [shape = 'u32[]', space=smem, size = 0x4, offset = 0x4, fixed_abs, tag = 'smem constant byte address 0x4 - core index']
  #allocation1 [shape = 'u32[144,128]{1,0:T(1,128)}', space=vmem, size = 0x12000, scoped, tag = 'internal scratch']
  %s0 = inlined_call_operand.vmem [shape: f32[16,32], index: 0, kind: input, shape index: {}]
  %s1 = inlined_call_operand.vmem [shape: f32[96,32], index: 1, kind: input, shape index: {}]
  %s2 = inlined_call_operand.hbm [shape: f32[16,96], index: 2, kind: output, shape index: {}]
  %s3 = sld [smem:[#allocation0]]
  $region18: #{tpu_custom_call.1} parent=0
    _
  %s5 = ssub.s32 1, %s3
  %s6 = scalar_select 0, %s5, %s3
  $region1: #{tpu_custom_call.1} parent=0
    #allocation2 [shape = 'u8[8192]{0}', space=vmem, size = 0x2000, scoped, tag = 'output window, operand 0, single buffered']
    #allocation3 [shape = 's32[1]{0}', space=sflag, size = 0x4, scoped, tag = 'scoped memory for tpu_custom_call.1']
    %7 = vsyncpa [#allocation3], 0
    // Predicated region
    $region2: #{tpu_custom_call.1} parent=1 // pred_check
      _
    $region3: #{tpu_custom_call.1} parent=1 // pred_check_branch
      %9 = sbr.rel (0) target = $region5
    $region4: #{tpu_custom_call.1} parent=1 // pred_region
      _
    $region5: #{tpu_custom_call.1} parent=1 // pred_fallthru
      _
    // Predicated region
    $region6: #{tpu_custom_call.1} parent=1 // pred_check
      _
    $region7: #{tpu_custom_call.1} parent=1 // pred_check_branch
      %11 = sbr.rel (0) target = $region9
    $region8: #{tpu_custom_call.1} parent=1 // pred_region
      _
    $region9: #{tpu_custom_call.1} parent=1 // pred_fallthru
      _
    %v12 = vld [vmem:[%s0] sm:$0xff]
    %v13 = vld [vmem:[%s0 + $0x8] sm:$0xff]
    %v14 = vld [vmem:[%s1] sm:$0xff]
    %v15 = vld [vmem:[%s1 + $0x8] sm:$0xff]
    %v16 = vld [vmem:[%s1 + $0x10] sm:$0xff]
    %v17 = vld [vmem:[%s1 + $0x18] sm:$0xff]
    %v18 = vld [vmem:[%s1 + $0x20] sm:$0xff]
    %v19 = vld [vmem:[%s1 + $0x28] sm:$0xff]
    %v20 = vld [vmem:[%s1 + $0x30] sm:$0xff]
    %v21 = vld [vmem:[%s1 + $0x38] sm:$0xff]
    %v22 = vld [vmem:[%s1 + $0x40] sm:$0xff]
    %v23 = vld [vmem:[%s1 + $0x48] sm:$0xff]
    %v24 = vld [vmem:[%s1 + $0x50] sm:$0xff]
    %v25 = vld [vmem:[%s1 + $0x58] sm:$0xff]
    %vm26 = vcmask 261120
    %v28 = vsel %vm26, %v12, 0
    %v31 = vsel %vm26, %v13, 0
    %v34 = vsel %vm26, %v14, 0
    %v37 = vsel %vm26, %v15, 0
    %v40 = vsel %vm26, %v16, 0
    %v43 = vsel %vm26, %v17, 0
    %v46 = vsel %vm26, %v18, 0
    %v49 = vsel %vm26, %v19, 0
    %v52 = vsel %vm26, %v20, 0
    %v55 = vsel %vm26, %v21, 0
    %v58 = vsel %vm26, %v22, 0
    %v61 = vsel %vm26, %v23, 0
    %v64 = vsel %vm26, %v24, 0
    %v67 = vsel %vm26, %v25, 0
    %69 = vmatprep.subr.mxu0 0.0
    %70 = vmatpush1.xpose.msra.mxu0 %v34
    %71 = vmatprep.subr.mxu0 0.0
    %72 = vmatpush1.xpose.msra.mxu0 %v37
    %73 = vmatprep.subr.mxu0 0.0
    %74 = vmatpush1.xpose.msra.mxu0 %v40
    %75 = vmatprep.subr.mxu0 0.0
    %76 = vmatpush1.xpose.msra.mxu0 %v43
    %77 = vmatprep.subr.mxu0 0.0
    %78 = vmatpush1.xpose.msra.mxu0 %v46
    %79 = vmatprep.subr.mxu0 0.0
    %80 = vmatpush1.xpose.msra.mxu0 %v49
    %81 = vmatprep.subr.mxu0 0.0
    %82 = vmatpush1.xpose.msra.mxu0 %v52
    %83 = vmatprep.subr.mxu0 0.0
    %84 = vmatpush1.xpose.msra.mxu0 %v55
    %85 = vmatprep.subr.mxu0 0.0
    %86 = vmatpush1.xpose.msra.mxu0 %v58
    %87 = vmatprep.subr.mxu0 0.0
    %88 = vmatpush1.xpose.msra.mxu0 %v61
    %89 = vmatprep.subr.mxu0 0.0
    %90 = vmatpush1.xpose.msra.mxu0 %v64
    %91 = vmatprep.subr.mxu0 0.0
    %92 = vmatpush1.xpose.msra.mxu0 %v67
    %93 = vmatprep.subr.mxu0 0.0
    %94 = vmatpush1.xpose.msra.mxu0 0.0
    %95 = vmatprep.subr.mxu0 0.0
    %96 = vmatpush1.xpose.msra.mxu0 0.0
    %97 = vmatprep.subr.mxu0 0.0
    %98 = vmatpush1.xpose.msra.mxu0 0.0
    %99 = vmatprep.subr.mxu0 0.0
    %100 = vmatpush1.xpose.msra.mxu0 0.0
    %101 = vmatprep.subr.mxu0 0.0
    %102 = vmatpush1.xpose.msra.mxu0 0.0
    %103 = vmatprep.subr.mxu0 0.0
    %104 = vmatpush1.xpose.msra.mxu0 0.0
    %105 = vmatprep.subr.mxu0 0.0
    %106 = vmatpush1.xpose.msra.mxu0 0.0
    %107 = vmatprep.subr.mxu0 0.0
    %108 = vmatpush1.xpose.msra.mxu0 0.0
    %109 = vmatprep.subr.mxu0 0.0
    %110 = vmatpush1.xpose.msra.mxu0 0.0
    %111 = vmatprep.subr.mxu0 0.0
    %112 = vmatpush1.xpose.msra.mxu0 0.0
    %113 = vmatprep.subr.mxu0 0.0
    %114 = vmatpush1.xpose.msra.mxu0 0.0
    %115 = vmatprep.subr.mxu0 0.0
    %116 = vmatpush1.xpose.msra.mxu0 0.0
    %117 = vmatprep.subr.mxu0 0.0
    %118 = vmatpush1.xpose.msra.mxu0 0.0
    %119 = vmatprep.subr.mxu0 0.0
    %120 = vmatpush1.xpose.msra.mxu0 0.0
    %121 = vmatprep.subr.mxu0 0.0
    %122 = vmatpush1.xpose.msra.mxu0 0.0
    %123 = vmatprep.subr.mxu0 0.0
    %124 = vmatpush1.xpose.msra.mxu0 0.0
    %125 = vmatprep.subr.mxu0 0.0
    %126 = vmatpush1.xpose.msra.mxu0 0.0
    %127 = vmatprep.subr.mxu0 0.0
    %128 = vmatpush1.xpose.msra.mxu0 0.0
    %129 = vmatprep.subr.mxu0 0.0
    %130 = vmatpush1.xpose.msra.mxu0 0.0
    %131 = vmatprep.subr.mxu0 0.0
    %132 = vmatpush1.xpose.msra.mxu0 0.0
    %133 = vmatprep.mubr.f32.mxu0 0.0
    %134 = vmatmul.mubr.f32.gmra.mrb[0].mxu0 %v28
    %v135 = vpop.f32.mrb[0].mxu0
    %v136 = vadd.f32 0.0, %v135
    %v137 = vpop.f32.mrb[0].mxu0
    %138 = vmatprep.mubr.f32.mxu0 0.0
    %139 = vmatmul.mubr.f32.gmra.mrb[0].mxu0 %v31
    %v140 = vpop.f32.mrb[0].mxu0
    %v141 = vadd.f32 0.0, %v140
    %v142 = vpop.f32.mrb[0].mxu0
    %143 = vdwg.mxu0
    %vm144 = vcmask 785408
    %145 = vst.msk [vmem:[#allocation2] sm:$0xff] %vm144, %v136
    %146 = vst.msk [vmem:[#allocation2 + $0x8] sm:$0xff] %vm144, %v141
    // Predicated region
    $region10: #{tpu_custom_call.1} parent=1 // pred_check
      _
    $region11: #{tpu_custom_call.1} parent=1 // pred_check_branch
      %148 = sbr.rel (0) target = $region13
    $region12: #{tpu_custom_call.1} parent=1 // pred_region
      %s150 = ssub.s32 256, 256
      %151 = vsyncadd [#allocation3], %s150
      %s152 = sshll.u32 [#allocation2], 4
      %s153 = int_to_ptr.vmem [resolvable:$true] %s152
      %158 = dma.vmem_to_hbm [thread:$0]  %s153, 256, %s2, [#allocation3], 128, 128, 8
    $region13: #{tpu_custom_call.1} parent=1 // pred_fallthru
      _
    // Predicated region
    $region14: #{tpu_custom_call.1} parent=1 // pred_check
      _
    $region15: #{tpu_custom_call.1} parent=1 // pred_check_branch
      %160 = sbr.rel (0) target = $region17
    $region16: #{tpu_custom_call.1} parent=1 // pred_region
      %161 = dma.done [#allocation3], 256
    $region17: #{tpu_custom_call.1} parent=1 // pred_fallthru
      _
    %162 = vsyncpa [#allocation3], 1

</llo_original>
